<compile_context>
chip_gen: v6e
topology: v6e:2x2x1
jax: 0.10.0
libtpu: 0.0.40
codegen_flags: <defaults>
</compile_context>

<pallas_src>
import jax
import jax.numpy as jnp
from jax.experimental import pallas as pl
from jax.experimental.pallas import tpu as pltpu


def simple_ff_kernel(x_ref, w1_ref, b1_ref, w2_ref, b2_ref,
                     w3_ref, b3_ref, w4_ref, b4_ref, o_ref):
    # All compute in f32: the MXU is <1% utilized at these widths, the kernel
    # is HBM/overhead-bound, so bf16 operands buy nothing.
    x = x_ref[...]
    h = jnp.dot(x, w1_ref[...], preferred_element_type=jnp.float32) + b1_ref[...]
    h = jnp.maximum(h, 0.0)

    h = jnp.dot(h, w2_ref[...], preferred_element_type=jnp.float32) + b2_ref[...]
    h = jnp.maximum(h, 0.0)

    h = jnp.dot(h, w3_ref[...], preferred_element_type=jnp.float32) + b3_ref[...]
    h = jnp.maximum(h, 0.0)

    # fc4 is pre-padded to 128 output columns (lane-dense compute only); the
    # padded bias columns are -1e30 so exp() is exactly 0 and the softmax over
    # the padded row equals softmax over the 4 real logits.
    logits = jnp.dot(h, w4_ref[...], preferred_element_type=jnp.float32) + b4_ref[...]
    m = jnp.max(logits, axis=-1, keepdims=True)
    e = jnp.exp(logits - m)
    denom = jnp.sum(e, axis=-1, keepdims=True)
    # exact reciprocal: approx=True would break the 1e-5 row-sum / allclose checks
    probs = e * pl.reciprocal(denom, approx=False)

    # Store only the real output columns — padded columns never hit HBM.
    n_out = o_ref.shape[-1]
    o_ref[...] = probs[:, :n_out].astype(o_ref.dtype)


def simple_ff(x, params, *, tile_b=4096, min_grid_steps=2):
    """x: [B, D_in] float32. params: dict name -> (w [in,out], b [1,out])."""
    B, d_in = x.shape
    w1, b1 = params["fc1"]
    w2, b2 = params["fc2"]
    w3, b3 = params["fc3"]
    w4, b4 = params["fc4"]
    n_out = w4.shape[1]

    # ---- lane-dense fc4 COMPUTE only: pad to a multiple of 128 output cols ----
    out_pad = ((n_out + 127) // 128) * 128
    w4p = jnp.pad(w4, ((0, 0), (0, out_pad - n_out)))
    b4p = jnp.pad(b4, ((0, 0), (0, out_pad - n_out)), constant_values=-1e30)

    # ---- batch tiling ----
    # Large tile to amortize per-grid-step overhead, but keep >= min_grid_steps
    # grid steps when the batch allows it so the "parallel" axis can feed both
    # of v7x's TensorCores (no-op on v5e/v6e).
    tb = min(tile_b, B)
    if B >= min_grid_steps * 8:
        tb = min(tb, pl.cdiv(B, min_grid_steps))
    if tb < B:
        tb = max(8, (tb // 8) * 8)          # sublane-aligned tiles
    b_pad = pl.cdiv(B, tb) * tb
    x_p = jnp.pad(x, ((0, b_pad - B), (0, 0))) if b_pad != B else x
    grid = (b_pad // tb,)

    def resident(a):
        # constant index_map -> loaded once into VMEM, reused every grid step
        return pl.BlockSpec(a.shape, lambda i: (0,) * a.ndim)

    # Advisory cost estimate: weights counted once, output at real width.
    weight_bytes = 4 * (w1.size + b1.size + w2.size + b2.size
                        + w3.size + b3.size + w4p.size + b4p.size)
    flops = 2 * B * (d_in * w1.shape[1]
                     + w1.shape[1] * w2.shape[1]
                     + w2.shape[1] * w3.shape[1]
                     + w3.shape[1] * out_pad)
    bytes_accessed = 4 * (x.size + B * n_out) + weight_bytes

    out = pl.pallas_call(
        simple_ff_kernel,
        out_shape=jax.ShapeDtypeStruct((b_pad, n_out), jnp.float32),
        grid=grid,
        in_specs=[
            pl.BlockSpec((tb, d_in), lambda i: (i, 0)),   # x tile (pipelined)
            resident(w1), resident(b1),
            resident(w2), resident(b2),
            resident(w3), resident(b3),
            resident(w4p), resident(b4p),
        ],
        out_specs=pl.BlockSpec((tb, n_out), lambda i: (i, 0)),
        compiler_params=pltpu.CompilerParams(
            dimension_semantics=("parallel",),
            # > v5e's 16 MiB default scoped limit, < v7x's 64 MiB physical.
            vmem_limit_bytes=48 * 1024 * 1024),
        cost_estimate=pl.CostEstimate(
            flops=flops,
            transcendentals=B * out_pad,
            bytes_accessed=bytes_accessed),
    )(x_p, w1, b1, w2, b2, w3, b3, w4p, b4p)

    return out[:B]


def init_params(key, d_in):
    """Deterministic init mimicking nn.Linear's U(-1/sqrt(fan_in), 1/sqrt(fan_in)).
    Weights stored [in, out] (transposed vs PyTorch) so the kernel does x @ W + b."""
    dims = [(d_in, 20), (20, 30), (30, 10), (10, 4)]
    names = ["fc1", "fc2", "fc3", "fc4"]
    params = {}
    for name, (fan_in, fan_out) in zip(names, dims):
        key, kw, kb = jax.random.split(key, 3)
        bound = 1.0 / (fan_in ** 0.5)
        w = jax.random.uniform(kw, (fan_in, fan_out), jnp.float32, -bound, bound)
        b = jax.random.uniform(kb, (1, fan_out), jnp.float32, -bound, bound)
        params[name] = (w, b)
    return params


def reference_ff(x, params):
    h = x
    for name in ["fc1", "fc2", "fc3"]:
        w, b = params[name]
        h = jnp.maximum(h @ w + b, 0.0)
    w, b = params["fc4"]
    return jax.nn.softmax(h @ w + b, axis=1)


if __name__ == "__main__":
    key = jax.random.PRNGKey(0)
    k_x, k_p, k_x2 = jax.random.split(key, 3)

    B, D_IN = 8, 32  # small shapes: batch=8, input feature dim=32
    x = jax.random.normal(k_x, (B, D_IN), jnp.float32)
    params = init_params(k_p, D_IN)

    # 1) single-tile path — strict check vs the PyTorch-equivalent reference
    out = jax.block_until_ready(simple_ff(x, params))
    ref = reference_ff(x, params)
    assert out.shape == (B, 4)
    assert jnp.allclose(out, ref, atol=1e-5, rtol=1e-5), "mismatch vs reference"
    assert jnp.allclose(jnp.sum(out, axis=1), 1.0, atol=1e-5), "softmax rows must sum to 1"

    # 2) multi-step batch grid (exercises tiling + batch padding), still exact
    B2 = 40
    x2 = jax.random.normal(k_x2, (B2, D_IN), jnp.float32)
    out2 = jax.block_until_ready(simple_ff(x2, params, tile_b=16))
    ref2 = reference_ff(x2, params)
    assert out2.shape == (B2, 4)
    assert jnp.allclose(out2, ref2, atol=1e-5, rtol=1e-5), "mismatch vs reference (tiled)"
    assert jnp.allclose(jnp.sum(out2, axis=1), 1.0, atol=1e-5), "softmax rows must sum to 1"

    print("KERNEL_OK")
</pallas_src>

<mosaic_0001>
module attributes {stable_mosaic.version = 11 : i64} {
  func.func @simple_ff_kernel(%arg0: i32, %arg1: memref<8x32xf32, #tpu.memory_space<vmem>>, %arg2: memref<32x20xf32, #tpu.memory_space<vmem>>, %arg3: memref<1x20xf32, #tpu.memory_space<vmem>>, %arg4: memref<20x30xf32, #tpu.memory_space<vmem>>, %arg5: memref<1x30xf32, #tpu.memory_space<vmem>>, %arg6: memref<30x10xf32, #tpu.memory_space<vmem>>, %arg7: memref<1x10xf32, #tpu.memory_space<vmem>>, %arg8: memref<10x128xf32, #tpu.memory_space<vmem>>, %arg9: memref<1x128xf32, #tpu.memory_space<vmem>>, %arg10: memref<8x4xf32, #tpu.memory_space<vmem>>) attributes {dimension_semantics = [#tpu.dimension_semantics<parallel>], iteration_bounds = array<i64: 1>, scalar_prefetch = 0 : i64, scratch_operands = 0 : i64, tpu.core_type = #tpu.core_type<tc>, window_params = [{transform_indices = @transform_0, window_bounds = array<i64: 8, 32>}, {pipeline_mode = #tpu.pipeline_mode<synchronous>, transform_indices = @transform_1, window_bounds = array<i64: 32, 20>}, {pipeline_mode = #tpu.pipeline_mode<synchronous>, transform_indices = @transform_2, window_bounds = array<i64: 1, 20>}, {pipeline_mode = #tpu.pipeline_mode<synchronous>, transform_indices = @transform_3, window_bounds = array<i64: 20, 30>}, {pipeline_mode = #tpu.pipeline_mode<synchronous>, transform_indices = @transform_4, window_bounds = array<i64: 1, 30>}, {pipeline_mode = #tpu.pipeline_mode<synchronous>, transform_indices = @transform_5, window_bounds = array<i64: 30, 10>}, {pipeline_mode = #tpu.pipeline_mode<synchronous>, transform_indices = @transform_6, window_bounds = array<i64: 1, 10>}, {pipeline_mode = #tpu.pipeline_mode<synchronous>, transform_indices = @transform_7, window_bounds = array<i64: 10, 128>}, {pipeline_mode = #tpu.pipeline_mode<synchronous>, transform_indices = @transform_8, window_bounds = array<i64: 1, 128>}, {transform_indices = @transform_9, window_bounds = array<i64: 8, 4>}]} {
    %c0 = arith.constant 0 : index
    %c0_0 = arith.constant 0 : index
    %0 = vector.load %arg1[%c0, %c0_0] : memref<8x32xf32, #tpu.memory_space<vmem>>, vector<8x32xf32>
    %c0_1 = arith.constant 0 : index
    %c0_2 = arith.constant 0 : index
    %1 = vector.load %arg2[%c0_1, %c0_2] : memref<32x20xf32, #tpu.memory_space<vmem>>, vector<32x20xf32>
    %cst = arith.constant dense<0.000000e+00> : vector<8x20xf32>
    %2 = tpu.matmul %0, %1, %cst {dimension_numbers = #tpu.dot_dimension_numbers<[1], [0], [0], [1], [0, 0, 1, 1], [], []>} : vector<8x32xf32>, vector<32x20xf32>, vector<8x20xf32> -> vector<8x20xf32>
    %c0_3 = arith.constant 0 : index
    %c0_4 = arith.constant 0 : index
    %3 = vector.load %arg3[%c0_3, %c0_4] : memref<1x20xf32, #tpu.memory_space<vmem>>, vector<1x20xf32>
    %4 = vector.broadcast %3 : vector<1x20xf32> to vector<8x20xf32>
    %5 = arith.addf %2, %4 : vector<8x20xf32>
    %cst_5 = arith.constant 0.000000e+00 : f32
    %6 = vector.broadcast %cst_5 : f32 to vector<8x20xf32>
    %7 = arith.maximumf %5, %6 : vector<8x20xf32>
    %c0_6 = arith.constant 0 : index
    %c0_7 = arith.constant 0 : index
    %8 = vector.load %arg4[%c0_6, %c0_7] : memref<20x30xf32, #tpu.memory_space<vmem>>, vector<20x30xf32>
    %cst_8 = arith.constant dense<0.000000e+00> : vector<8x30xf32>
    %9 = tpu.matmul %7, %8, %cst_8 {dimension_numbers = #tpu.dot_dimension_numbers<[1], [0], [0], [1], [0, 0, 1, 1], [], []>} : vector<8x20xf32>, vector<20x30xf32>, vector<8x30xf32> -> vector<8x30xf32>
    %c0_9 = arith.constant 0 : index
    %c0_10 = arith.constant 0 : index
    %10 = vector.load %arg5[%c0_9, %c0_10] : memref<1x30xf32, #tpu.memory_space<vmem>>, vector<1x30xf32>
    %11 = vector.broadcast %10 : vector<1x30xf32> to vector<8x30xf32>
    %12 = arith.addf %9, %11 : vector<8x30xf32>
    %cst_11 = arith.constant 0.000000e+00 : f32
    %13 = vector.broadcast %cst_11 : f32 to vector<8x30xf32>
    %14 = arith.maximumf %12, %13 : vector<8x30xf32>
    %c0_12 = arith.constant 0 : index
    %c0_13 = arith.constant 0 : index
    %15 = vector.load %arg6[%c0_12, %c0_13] : memref<30x10xf32, #tpu.memory_space<vmem>>, vector<30x10xf32>
    %cst_14 = arith.constant dense<0.000000e+00> : vector<8x10xf32>
    %16 = tpu.matmul %14, %15, %cst_14 {dimension_numbers = #tpu.dot_dimension_numbers<[1], [0], [0], [1], [0, 0, 1, 1], [], []>} : vector<8x30xf32>, vector<30x10xf32>, vector<8x10xf32> -> vector<8x10xf32>
    %c0_15 = arith.constant 0 : index
    %c0_16 = arith.constant 0 : index
    %17 = vector.load %arg7[%c0_15, %c0_16] : memref<1x10xf32, #tpu.memory_space<vmem>>, vector<1x10xf32>
    %18 = vector.broadcast %17 : vector<1x10xf32> to vector<8x10xf32>
    %19 = arith.addf %16, %18 : vector<8x10xf32>
    %cst_17 = arith.constant 0.000000e+00 : f32
    %20 = vector.broadcast %cst_17 : f32 to vector<8x10xf32>
    %21 = arith.maximumf %19, %20 : vector<8x10xf32>
    %c0_18 = arith.constant 0 : index
    %c0_19 = arith.constant 0 : index
    %22 = vector.load %arg8[%c0_18, %c0_19] : memref<10x128xf32, #tpu.memory_space<vmem>>, vector<10x128xf32>
    %cst_20 = arith.constant dense<0.000000e+00> : vector<8x128xf32>
    %23 = tpu.matmul %21, %22, %cst_20 {dimension_numbers = #tpu.dot_dimension_numbers<[1], [0], [0], [1], [0, 0, 1, 1], [], []>} : vector<8x10xf32>, vector<10x128xf32>, vector<8x128xf32> -> vector<8x128xf32>
    %c0_21 = arith.constant 0 : index
    %c0_22 = arith.constant 0 : index
    %24 = vector.load %arg9[%c0_21, %c0_22] : memref<1x128xf32, #tpu.memory_space<vmem>>, vector<1x128xf32>
    %25 = vector.broadcast %24 : vector<1x128xf32> to vector<8x128xf32>
    %26 = arith.addf %23, %25 : vector<8x128xf32>
    %cst_23 = arith.constant dense<0xFF800000> : vector<8xf32>
    %27 = vector.multi_reduction <maximumf>, %26, %cst_23 [1] : vector<8x128xf32> to vector<8xf32>
    %28 = vector.shape_cast %27 : vector<8xf32> to vector<8x1xf32>
    %29 = vector.broadcast %28 : vector<8x1xf32> to vector<8x128xf32>
    %30 = arith.subf %26, %29 : vector<8x128xf32>
    %31 = math.exp %30 : vector<8x128xf32>
    %cst_24 = arith.constant dense<0.000000e+00> : vector<8xf32>
    %32 = vector.multi_reduction <add>, %31, %cst_24 [1] : vector<8x128xf32> to vector<8xf32>
    %33 = vector.shape_cast %32 : vector<8xf32> to vector<8x1xf32>
    %34 = tpu.reciprocal %33 : vector<8x1xf32> -> vector<8x1xf32>
    %35 = vector.broadcast %34 : vector<8x1xf32> to vector<8x128xf32>
    %36 = arith.mulf %31, %35 : vector<8x128xf32>
    %37 = vector.extract_strided_slice %36 {offsets = [0, 0], sizes = [8, 4], strides = [1, 1]} : vector<8x128xf32> to vector<8x4xf32>
    %c0_25 = arith.constant 0 : index
    %c0_26 = arith.constant 0 : index
    %38 = vector.load %arg10[%c0_25, %c0_26] : memref<8x4xf32, #tpu.memory_space<vmem>>, vector<8x4xf32>
    tpu.vector_store %arg10[%c0_25, %c0_26], %37 {strides = array<i32>} : memref<8x4xf32, #tpu.memory_space<vmem>>, vector<8x4xf32>,
    return
  }
  func.func @transform_0(%arg0: i32) -> (i32, i32) {
    %c0_i32 = arith.constant 0 : i32
    %c0_i32_0 = arith.constant 0 : i32
    return %arg0, %c0_i32 : i32, i32
  }
  func.func @transform_1(%arg0: i32) -> (i32, i32) {
    %c0_i32 = arith.constant 0 : i32
    %c0_i32_0 = arith.constant 0 : i32
    %c0_i32_1 = arith.constant 0 : i32
    return %c0_i32, %c0_i32_0 : i32, i32
  }
  func.func @transform_2(%arg0: i32) -> (i32, i32) {
    %c0_i32 = arith.constant 0 : i32
    %c0_i32_0 = arith.constant 0 : i32
    %c0_i32_1 = arith.constant 0 : i32
    return %c0_i32, %c0_i32_0 : i32, i32
  }
  func.func @transform_3(%arg0: i32) -> (i32, i32) {
    %c0_i32 = arith.constant 0 : i32
    %c0_i32_0 = arith.constant 0 : i32
    %c0_i32_1 = arith.constant 0 : i32
    return %c0_i32, %c0_i32_0 : i32, i32
  }
  func.func @transform_4(%arg0: i32) -> (i32, i32) {
    %c0_i32 = arith.constant 0 : i32
    %c0_i32_0 = arith.constant 0 : i32
    %c0_i32_1 = arith.constant 0 : i32
    return %c0_i32, %c0_i32_0 : i32, i32
  }
  func.func @transform_5(%arg0: i32) -> (i32, i32) {
    %c0_i32 = arith.constant 0 : i32
    %c0_i32_0 = arith.constant 0 : i32
    %c0_i32_1 = arith.constant 0 : i32
    return %c0_i32, %c0_i32_0 : i32, i32
  }
  func.func @transform_6(%arg0: i32) -> (i32, i32) {
    %c0_i32 = arith.constant 0 : i32
    %c0_i32_0 = arith.constant 0 : i32
    %c0_i32_1 = arith.constant 0 : i32
    return %c0_i32, %c0_i32_0 : i32, i32
  }
  func.func @transform_7(%arg0: i32) -> (i32, i32) {
    %c0_i32 = arith.constant 0 : i32
    %c0_i32_0 = arith.constant 0 : i32
    %c0_i32_1 = arith.constant 0 : i32
    return %c0_i32, %c0_i32_0 : i32, i32
  }
  func.func @transform_8(%arg0: i32) -> (i32, i32) {
    %c0_i32 = arith.constant 0 : i32
    %c0_i32_0 = arith.constant 0 : i32
    %c0_i32_1 = arith.constant 0 : i32
    return %c0_i32, %c0_i32_0 : i32, i32
  }
  func.func @transform_9(%arg0: i32) -> (i32, i32) {
    %c0_i32 = arith.constant 0 : i32
    %c0_i32_0 = arith.constant 0 : i32
    return %arg0, %c0_i32 : i32, i32
  }
}

</mosaic_0001>

<llo_original>
// kernel: tpu_custom_call.1
$region0: #{tpu_custom_call.1}
  #allocation0 [shape = 'u32[]', space=smem, size = 0x4, offset = 0x4, fixed_abs, tag = 'smem constant byte address 0x4 - core index']
  #allocation1 [shape = 'u32[144,128]{1,0:T(1,128)}', space=vmem, size = 0x12000, scoped, tag = 'internal scratch']
  %s0 = inlined_call_operand.vmem [shape: f32[8,32], index: 0, kind: input, shape index: {}]
  %s1 = inlined_call_operand.vmem [shape: f32[32,20], index: 1, kind: input, shape index: {}]
  %s2 = inlined_call_operand.vmem [shape: f32[1,20], index: 2, kind: input, shape index: {}]
  %s3 = inlined_call_operand.vmem [shape: f32[20,30], index: 3, kind: input, shape index: {}]
  %s4 = inlined_call_operand.vmem [shape: f32[1,30], index: 4, kind: input, shape index: {}]
  %s5 = inlined_call_operand.vmem [shape: f32[30,10], index: 5, kind: input, shape index: {}]
  %s6 = inlined_call_operand.vmem [shape: f32[1,10], index: 6, kind: input, shape index: {}]
  %s7 = inlined_call_operand.vmem [shape: f32[10,128], index: 7, kind: input, shape index: {}]
  %s8 = inlined_call_operand.vmem [shape: f32[1,128], index: 8, kind: input, shape index: {}]
  %s9 = inlined_call_operand.vmem [shape: f32[8,4], index: 9, kind: output, shape index: {}]
  %s10 = sld [smem:[#allocation0]]
  $region46: #{tpu_custom_call.1} parent=0
    _
  %s12 = ssub.s32 1, %s10
  %s13 = scalar_select 0, %s12, %s10
  // Predicated region
  $region2: #{tpu_custom_call.1} parent=0 // pred_check
    _
  $region3: #{tpu_custom_call.1} parent=0 // pred_check_branch
    %15 = sbr.rel (0) target = $region5
  $region4: #{tpu_custom_call.1} parent=0 // pred_region
    _
  $region5: #{tpu_custom_call.1} parent=0 // pred_fallthru
    _
  // Predicated region
  $region6: #{tpu_custom_call.1} parent=0 // pred_check
    _
  $region7: #{tpu_custom_call.1} parent=0 // pred_check_branch
    %17 = sbr.rel (0) target = $region9
  $region8: #{tpu_custom_call.1} parent=0 // pred_region
    _
  $region9: #{tpu_custom_call.1} parent=0 // pred_fallthru
    _
  // Predicated region
  $region10: #{tpu_custom_call.1} parent=0 // pred_check
    _
  $region11: #{tpu_custom_call.1} parent=0 // pred_check_branch
    %19 = sbr.rel (0) target = $region13
  $region12: #{tpu_custom_call.1} parent=0 // pred_region
    _
  $region13: #{tpu_custom_call.1} parent=0 // pred_fallthru
    _
  // Predicated region
  $region14: #{tpu_custom_call.1} parent=0 // pred_check
    _
  $region15: #{tpu_custom_call.1} parent=0 // pred_check_branch
    %21 = sbr.rel (0) target = $region17
  $region16: #{tpu_custom_call.1} parent=0 // pred_region
    _
  $region17: #{tpu_custom_call.1} parent=0 // pred_fallthru
    _
  // Predicated region
  $region18: #{tpu_custom_call.1} parent=0 // pred_check
    _
  $region19: #{tpu_custom_call.1} parent=0 // pred_check_branch
    %23 = sbr.rel (0) target = $region21
  $region20: #{tpu_custom_call.1} parent=0 // pred_region
    _
  $region21: #{tpu_custom_call.1} parent=0 // pred_fallthru
    _
  // Predicated region
  $region22: #{tpu_custom_call.1} parent=0 // pred_check
    _
  $region23: #{tpu_custom_call.1} parent=0 // pred_check_branch
    %25 = sbr.rel (0) target = $region25
  $region24: #{tpu_custom_call.1} parent=0 // pred_region
    _
  $region25: #{tpu_custom_call.1} parent=0 // pred_fallthru
    _
  // Predicated region
  $region26: #{tpu_custom_call.1} parent=0 // pred_check
    _
  $region27: #{tpu_custom_call.1} parent=0 // pred_check_branch
    %27 = sbr.rel (0) target = $region29
  $region28: #{tpu_custom_call.1} parent=0 // pred_region
    _
  $region29: #{tpu_custom_call.1} parent=0 // pred_fallthru
    _
  // Predicated region
  $region30: #{tpu_custom_call.1} parent=0 // pred_check
    _
  $region31: #{tpu_custom_call.1} parent=0 // pred_check_branch
    %29 = sbr.rel (0) target = $region33
  $region32: #{tpu_custom_call.1} parent=0 // pred_region
    _
  $region33: #{tpu_custom_call.1} parent=0 // pred_fallthru
    _
  // Predicated region
  $region34: #{tpu_custom_call.1} parent=0 // pred_check
    _
  $region35: #{tpu_custom_call.1} parent=0 // pred_check_branch
    %31 = sbr.rel (0) target = $region37
  $region36: #{tpu_custom_call.1} parent=0 // pred_region
    _
  $region37: #{tpu_custom_call.1} parent=0 // pred_fallthru
    _
  %v32 = vld [vmem:[%s0] sm:$0xff]
  %v33 = vld [vmem:[%s1] sm:$0xff]
  %v34 = vld [vmem:[%s1 + $0x8] sm:$0xff]
  %v35 = vld [vmem:[%s1 + $0x10] sm:$0xff]
  %v36 = vld [vmem:[%s1 + $0x18] sm:$0xff]
  %v37 = vld [vmem:[%s2] sm:$0x1]
  %v39 = vlaneseq
  %v40 = vshrl.u32 %v39, 7
  %v41 = vsub.s32 0, %v40
  %v42 = vrot.slane %v37, %v41
  %vm44 = vcmask 261120
  %v46 = vsel %vm44, %v32, 0
  %48 = vmatprep.subr.mxu0 0.0
  %49 = vmatpush1.msra.mxu0 0.0
  %50 = vmatprep.subr.mxu0 0.0
  %51 = vmatpush1.msra.mxu0 0.0
  %52 = vmatprep.subr.mxu0 0.0
  %53 = vmatpush1.msra.mxu0 0.0
  %54 = vmatprep.subr.mxu0 0.0
  %55 = vmatpush1.msra.mxu0 0.0
  %56 = vmatprep.subr.mxu0 0.0
  %57 = vmatpush1.msra.mxu0 0.0
  %58 = vmatprep.subr.mxu0 0.0
  %59 = vmatpush1.msra.mxu0 0.0
  %60 = vmatprep.subr.mxu0 0.0
  %61 = vmatpush1.msra.mxu0 0.0
  %62 = vmatprep.subr.mxu0 0.0
  %63 = vmatpush1.msra.mxu0 0.0
  %64 = vmatprep.subr.mxu0 0.0
  %65 = vmatpush1.msra.mxu0 0.0
  %66 = vmatprep.subr.mxu0 0.0
  %67 = vmatpush1.msra.mxu0 0.0
  %68 = vmatprep.subr.mxu0 0.0
  %69 = vmatpush1.msra.mxu0 0.0
  %70 = vmatprep.subr.mxu0 0.0
  %71 = vmatpush1.msra.mxu0 0.0
  %72 = vmatprep.subr.mxu0 0.0
  %73 = vmatpush1.msra.mxu0 %v36
  %74 = vmatprep.subr.mxu0 0.0
  %75 = vmatpush1.msra.mxu0 %v35
  %76 = vmatprep.subr.mxu0 0.0
  %77 = vmatpush1.msra.mxu0 %v34
  %78 = vmatprep.subr.mxu0 0.0
  %79 = vmatpush1.msra.mxu0 %v33
  %80 = vmatprep.subr.mxu0 0.0
  %81 = vmatpush2.msra.mxu0 0.0
  %82 = vmatprep.subr.mxu0 0.0
  %83 = vmatpush2.msra.mxu0 0.0
  %84 = vmatprep.subr.mxu0 0.0
  %85 = vmatpush2.msra.mxu0 0.0
  %86 = vmatprep.subr.mxu0 0.0
  %87 = vmatpush2.msra.mxu0 0.0
  %88 = vmatprep.subr.mxu0 0.0
  %89 = vmatpush2.msra.mxu0 0.0
  %90 = vmatprep.subr.mxu0 0.0
  %91 = vmatpush2.msra.mxu0 0.0
  %92 = vmatprep.subr.mxu0 0.0
  %93 = vmatpush2.msra.mxu0 0.0
  %94 = vmatprep.subr.mxu0 0.0
  %95 = vmatpush2.msra.mxu0 0.0
  %96 = vmatprep.subr.mxu0 0.0
  %97 = vmatpush2.msra.mxu0 0.0
  %98 = vmatprep.subr.mxu0 0.0
  %99 = vmatpush2.msra.mxu0 0.0
  %100 = vmatprep.subr.mxu0 0.0
  %101 = vmatpush2.msra.mxu0 0.0
  %102 = vmatprep.subr.mxu0 0.0
  %103 = vmatpush2.msra.mxu0 0.0
  %104 = vmatprep.subr.mxu0 0.0
  %105 = vmatpush2.msra.mxu0 0.0
  %106 = vmatprep.subr.mxu0 0.0
  %107 = vmatpush2.msra.mxu0 0.0
  %108 = vmatprep.subr.mxu0 0.0
  %109 = vmatpush2.msra.mxu0 0.0
  %110 = vmatprep.subr.mxu0 0.0
  %111 = vmatpush2.msra.mxu0 0.0
  %112 = vmatprep.mubr.f32.mxu0 0.0
  %113 = vmatmul.mubr.f32.gmra.mxu0 %v46
  %v114 = vpop.f32.mrf.mxu0
  %v115 = vadd.f32 %v42, %v114
  %v116 = vpop.f32.mrf.mxu0
  %117 = vdwg.mxu0
  %v118 = vmax.f32 %v115, 0.0
  %v119 = vld [vmem:[%s3] sm:$0xff]
  %v120 = vld [vmem:[%s3 + $0x8] sm:$0xff]
  %v121 = vld [vmem:[%s3 + $0x10] sm:$0xf]
  %v122 = vld [vmem:[%s4] sm:$0x1]
  %v124 = vlaneseq
  %v125 = vshrl.u32 %v124, 7
  %v126 = vsub.s32 0, %v125
  %v127 = vrot.slane %v122, %v126
  %vm129 = vcmask 162816
  %v131 = vsel %vm129, %v118, 0
  %vm133 = vcmask 1043456
  %v135 = vsel %vm133, %v121, 0
  %137 = vmatprep.subr.mxu0 0.0
  %138 = vmatpush1.msra.mxu0 0.0
  %139 = vmatprep.subr.mxu0 0.0
  %140 = vmatpush1.msra.mxu0 0.0
  %141 = vmatprep.subr.mxu0 0.0
  %142 = vmatpush1.msra.mxu0 0.0
  %143 = vmatprep.subr.mxu0 0.0
  %144 = vmatpush1.msra.mxu0 0.0
  %145 = vmatprep.subr.mxu0 0.0
  %146 = vmatpush1.msra.mxu0 0.0
  %147 = vmatprep.subr.mxu0 0.0
  %148 = vmatpush1.msra.mxu0 0.0
  %149 = vmatprep.subr.mxu0 0.0
  %150 = vmatpush1.msra.mxu0 0.0
  %151 = vmatprep.subr.mxu0 0.0
  %152 = vmatpush1.msra.mxu0 0.0
  %153 = vmatprep.subr.mxu0 0.0
  %154 = vmatpush1.msra.mxu0 0.0
  %155 = vmatprep.subr.mxu0 0.0
  %156 = vmatpush1.msra.mxu0 0.0
  %157 = vmatprep.subr.mxu0 0.0
  %158 = vmatpush1.msra.mxu0 0.0
  %159 = vmatprep.subr.mxu0 0.0
  %160 = vmatpush1.msra.mxu0 0.0
  %161 = vmatprep.subr.mxu0 0.0
  %162 = vmatpush1.msra.mxu0 0.0
  %163 = vmatprep.subr.mxu0 0.0
  %164 = vmatpush1.msra.mxu0 %v135
  %165 = vmatprep.subr.mxu0 0.0
  %166 = vmatpush1.msra.mxu0 %v120
  %167 = vmatprep.subr.mxu0 0.0
  %168 = vmatpush1.msra.mxu0 %v119
  %169 = vmatprep.subr.mxu0 0.0
  %170 = vmatpush2.msra.mxu0 0.0
  %171 = vmatprep.subr.mxu0 0.0
  %172 = vmatpush2.msra.mxu0 0.0
  %173 = vmatprep.subr.mxu0 0.0
  %174 = vmatpush2.msra.mxu0 0.0
  %175 = vmatprep.subr.mxu0 0.0
  %176 = vmatpush2.msra.mxu0 0.0
  %177 = vmatprep.subr.mxu0 0.0
  %178 = vmatpush2.msra.mxu0 0.0
  %179 = vmatprep.subr.mxu0 0.0
  %180 = vmatpush2.msra.mxu0 0.0
  %181 = vmatprep.subr.mxu0 0.0
  %182 = vmatpush2.msra.mxu0 0.0
  %183 = vmatprep.subr.mxu0 0.0
  %184 = vmatpush2.msra.mxu0 0.0
  %185 = vmatprep.subr.mxu0 0.0
  %186 = vmatpush2.msra.mxu0 0.0
  %187 = vmatprep.subr.mxu0 0.0
  %188 = vmatpush2.msra.mxu0 0.0
  %189 = vmatprep.subr.mxu0 0.0
  %190 = vmatpush2.msra.mxu0 0.0
  %191 = vmatprep.subr.mxu0 0.0
  %192 = vmatpush2.msra.mxu0 0.0
  %193 = vmatprep.subr.mxu0 0.0
  %194 = vmatpush2.msra.mxu0 0.0
  %195 = vmatprep.subr.mxu0 0.0
  %196 = vmatpush2.msra.mxu0 0.0
  %197 = vmatprep.subr.mxu0 0.0
  %198 = vmatpush2.msra.mxu0 0.0
  %199 = vmatprep.subr.mxu0 0.0
  %200 = vmatpush2.msra.mxu0 0.0
  %201 = vmatprep.mubr.f32.mxu0 0.0
  %202 = vmatmul.mubr.f32.gmra.mxu0 %v131
  %v203 = vpop.f32.mrf.mxu0
  %v204 = vadd.f32 %v127, %v203
  %v205 = vpop.f32.mrf.mxu0
  %206 = vdwg.mxu0
  %v207 = vmax.f32 %v204, 0.0
  %v208 = vld [vmem:[%s5] sm:$0xff]
  %v209 = vld [vmem:[%s5 + $0x8] sm:$0xff]
  %v210 = vld [vmem:[%s5 + $0x10] sm:$0xff]
  %v211 = vld [vmem:[%s5 + $0x18] sm:$0x3f]
  %v212 = vld [vmem:[%s6] sm:$0x1]
  %v214 = vlaneseq
  %v215 = vshrl.u32 %v214, 7
  %v216 = vsub.s32 0, %v215
  %v217 = vrot.slane %v212, %v216
  %vm219 = vcmask 244736
  %v221 = vsel %vm219, %v207, 0
  %vm223 = vcmask 1045504
  %v225 = vsel %vm223, %v211, 0
  %227 = vmatprep.subr.mxu0 0.0
  %228 = vmatpush1.msra.mxu0 0.0
  %229 = vmatprep.subr.mxu0 0.0
  %230 = vmatpush1.msra.mxu0 0.0
  %231 = vmatprep.subr.mxu0 0.0
  %232 = vmatpush1.msra.mxu0 0.0
  %233 = vmatprep.subr.mxu0 0.0
  %234 = vmatpush1.msra.mxu0 0.0
  %235 = vmatprep.subr.mxu0 0.0
  %236 = vmatpush1.msra.mxu0 0.0
  %237 = vmatprep.subr.mxu0 0.0
  %238 = vmatpush1.msra.mxu0 0.0
  %239 = vmatprep.subr.mxu0 0.0
  %240 = vmatpush1.msra.mxu0 0.0
  %241 = vmatprep.subr.mxu0 0.0
  %242 = vmatpush1.msra.mxu0 0.0
  %243 = vmatprep.subr.mxu0 0.0
  %244 = vmatpush1.msra.mxu0 0.0
  %245 = vmatprep.subr.mxu0 0.0
  %246 = vmatpush1.msra.mxu0 0.0
  %247 = vmatprep.subr.mxu0 0.0
  %248 = vmatpush1.msra.mxu0 0.0
  %249 = vmatprep.subr.mxu0 0.0
  %250 = vmatpush1.msra.mxu0 0.0
  %251 = vmatprep.subr.mxu0 0.0
  %252 = vmatpush1.msra.mxu0 %v225
  %253 = vmatprep.subr.mxu0 0.0
  %254 = vmatpush1.msra.mxu0 %v210
  %255 = vmatprep.subr.mxu0 0.0
  %256 = vmatpush1.msra.mxu0 %v209
  %257 = vmatprep.subr.mxu0 0.0
  %258 = vmatpush1.msra.mxu0 %v208
  %259 = vmatprep.subr.mxu0 0.0
  %260 = vmatpush2.msra.mxu0 0.0
  %261 = vmatprep.subr.mxu0 0.0
  %262 = vmatpush2.msra.mxu0 0.0
  %263 = vmatprep.subr.mxu0 0.0
  %264 = vmatpush2.msra.mxu0 0.0
  %265 = vmatprep.subr.mxu0 0.0
  %266 = vmatpush2.msra.mxu0 0.0
  %267 = vmatprep.subr.mxu0 0.0
  %268 = vmatpush2.msra.mxu0 0.0
  %269 = vmatprep.subr.mxu0 0.0
  %270 = vmatpush2.msra.mxu0 0.0
  %271 = vmatprep.subr.mxu0 0.0
  %272 = vmatpush2.msra.mxu0 0.0
  %273 = vmatprep.subr.mxu0 0.0
  %274 = vmatpush2.msra.mxu0 0.0
  %275 = vmatprep.subr.mxu0 0.0
  %276 = vmatpush2.msra.mxu0 0.0
  %277 = vmatprep.subr.mxu0 0.0
  %278 = vmatpush2.msra.mxu0 0.0
  %279 = vmatprep.subr.mxu0 0.0
  %280 = vmatpush2.msra.mxu0 0.0
  %281 = vmatprep.subr.mxu0 0.0
  %282 = vmatpush2.msra.mxu0 0.0
  %283 = vmatprep.subr.mxu0 0.0
  %284 = vmatpush2.msra.mxu0 0.0
  %285 = vmatprep.subr.mxu0 0.0
  %286 = vmatpush2.msra.mxu0 0.0
  %287 = vmatprep.subr.mxu0 0.0
  %288 = vmatpush2.msra.mxu0 0.0
  %289 = vmatprep.subr.mxu0 0.0
  %290 = vmatpush2.msra.mxu0 0.0
  %291 = vmatprep.mubr.f32.mxu0 0.0
  %292 = vmatmul.mubr.f32.gmra.mxu0 %v221
  %v293 = vpop.f32.mrf.mxu0
  %v294 = vadd.f32 %v217, %v293
  %v295 = vpop.f32.mrf.mxu0
  %296 = vdwg.mxu0
  %v297 = vmax.f32 %v294, 0.0
  %v298 = vld [vmem:[%s7] sm:$0xff]
  %v299 = vld [vmem:[%s7 + $0x8] sm:$0x3]
  %v300 = vld [vmem:[%s8] sm:$0x1]
  %v302 = vlaneseq
  %v303 = vshrl.u32 %v302, 7
  %v304 = vsub.s32 0, %v303
  %v305 = vrot.slane %v300, %v304
  %vm307 = vcmask 80896
  %v309 = vsel %vm307, %v297, 0
  %vm311 = vcmask 1041408
  %v313 = vsel %vm311, %v299, 0
  %315 = vmatprep.subr.mxu0 0.0
  %316 = vmatpush1.msra.mxu0 0.0
  %317 = vmatprep.subr.mxu0 0.0
  %318 = vmatpush1.msra.mxu0 0.0
  %319 = vmatprep.subr.mxu0 0.0
  %320 = vmatpush1.msra.mxu0 0.0
  %321 = vmatprep.subr.mxu0 0.0
  %322 = vmatpush1.msra.mxu0 0.0
  %323 = vmatprep.subr.mxu0 0.0
  %324 = vmatpush1.msra.mxu0 0.0
  %325 = vmatprep.subr.mxu0 0.0
  %326 = vmatpush1.msra.mxu0 0.0
  %327 = vmatprep.subr.mxu0 0.0
  %328 = vmatpush1.msra.mxu0 0.0
  %329 = vmatprep.subr.mxu0 0.0
  %330 = vmatpush1.msra.mxu0 0.0
  %331 = vmatprep.subr.mxu0 0.0
  %332 = vmatpush1.msra.mxu0 0.0
  %333 = vmatprep.subr.mxu0 0.0
  %334 = vmatpush1.msra.mxu0 0.0
  %335 = vmatprep.subr.mxu0 0.0
  %336 = vmatpush1.msra.mxu0 0.0
  %337 = vmatprep.subr.mxu0 0.0
  %338 = vmatpush1.msra.mxu0 0.0
  %339 = vmatprep.subr.mxu0 0.0
  %340 = vmatpush1.msra.mxu0 0.0
  %341 = vmatprep.subr.mxu0 0.0
  %342 = vmatpush1.msra.mxu0 0.0
  %343 = vmatprep.subr.mxu0 0.0
  %344 = vmatpush1.msra.mxu0 %v313
  %345 = vmatprep.subr.mxu0 0.0
  %346 = vmatpush1.msra.mxu0 %v298
  %347 = vmatprep.subr.mxu0 0.0
  %348 = vmatpush2.msra.mxu0 0.0
  %349 = vmatprep.subr.mxu0 0.0
  %350 = vmatpush2.msra.mxu0 0.0
  %351 = vmatprep.subr.mxu0 0.0
  %352 = vmatpush2.msra.mxu0 0.0
  %353 = vmatprep.subr.mxu0 0.0
  %354 = vmatpush2.msra.mxu0 0.0
  %355 = vmatprep.subr.mxu0 0.0
  %356 = vmatpush2.msra.mxu0 0.0
  %357 = vmatprep.subr.mxu0 0.0
  %358 = vmatpush2.msra.mxu0 0.0
  %359 = vmatprep.subr.mxu0 0.0
  %360 = vmatpush2.msra.mxu0 0.0
  %361 = vmatprep.subr.mxu0 0.0
  %362 = vmatpush2.msra.mxu0 0.0
  %363 = vmatprep.subr.mxu0 0.0
  %364 = vmatpush2.msra.mxu0 0.0
  %365 = vmatprep.subr.mxu0 0.0
  %366 = vmatpush2.msra.mxu0 0.0
  %367 = vmatprep.subr.mxu0 0.0
  %368 = vmatpush2.msra.mxu0 0.0
  %369 = vmatprep.subr.mxu0 0.0
  %370 = vmatpush2.msra.mxu0 0.0
  %371 = vmatprep.subr.mxu0 0.0
  %372 = vmatpush2.msra.mxu0 0.0
  %373 = vmatprep.subr.mxu0 0.0
  %374 = vmatpush2.msra.mxu0 0.0
  %375 = vmatprep.subr.mxu0 0.0
  %376 = vmatpush2.msra.mxu0 0.0
  %377 = vmatprep.subr.mxu0 0.0
  %378 = vmatpush2.msra.mxu0 0.0
  %379 = vmatprep.mubr.f32.mxu0 0.0
  %380 = vmatmul.mubr.f32.gmra.mxu0 %v309
  %v381 = vpop.f32.mrf.mxu0
  %v382 = vadd.f32 %v305, %v381
  %v383 = vpop.f32.mrf.mxu0
  %384 = vdwg.mxu0
  %385 = vmax.xlane.f32.xlu0 %v382
  %v386 = vpop.xlane.xlu0 %385
  %v387 = vsub.f32 %v382, %v386
  %v388 = vmul.f32 %v387, 1.442695
  %v389 = vpow.pop %v388
  %390 = vadd.xlane.f32.xlu0 %v389
  %v391 = vpop.xlane.xlu0 %390
  %v392 = vrcp.pop %v391
  %v393 = vmul.f32 %v389, %v392
  %vm394 = vcmask 31744
  %395 = vst.msk [vmem:[%s9] sm:$0xff] %vm394, %v393
  // Predicated region
  $region38: #{tpu_custom_call.1} parent=0 // pred_check
    _
  $region39: #{tpu_custom_call.1} parent=0 // pred_check_branch
    %397 = sbr.rel (0) target = $region41
  $region40: #{tpu_custom_call.1} parent=0 // pred_region
    _
  $region41: #{tpu_custom_call.1} parent=0 // pred_fallthru
    _
  // Predicated region
  $region42: #{tpu_custom_call.1} parent=0 // pred_check
    _
  $region43: #{tpu_custom_call.1} parent=0 // pred_check_branch
    %399 = sbr.rel (0) target = $region45
  $region44: #{tpu_custom_call.1} parent=0 // pred_region
    _
  $region45: #{tpu_custom_call.1} parent=0 // pred_fallthru
    _

</llo_original>
